<compile_context>
chip_gen: v6e
topology: v6e:2x2x1
jax: 0.10.0
libtpu: 0.0.40
codegen_flags: <defaults>
</compile_context>

<pallas_src>
import jax
import jax.numpy as jnp
from jax.experimental import pallas as pl
from jax.experimental.pallas import tpu as pltpu


def _make_kernel(n_valid, tn, tiles_per_split, needs_mask):
    """Build the kernel with static tile geometry baked in."""

    def kernel(x0_ref, x1_ref, x2_ref, w_ref, o_ref, md_ref,
               m_ref, g0_ref, g1_ref, g2_ref):
        # x{0,1,2}_ref: [C, TN]  three vector components of this N tile
        # w_ref:        [C, C]   dense channel-mixing weight (nn.Linear, no bias)
        # o_ref:        [C, 3]   per-(batch, split) gathered vectors (written once)
        # md_ref:       [C, 1]   per-(batch, split) max dot-product (written once)
        # m_ref, g{0,1,2}_ref: VMEM scratch running state
        s = pl.program_id(1)
        t = pl.program_id(2)

        @pl.when(t == 0)
        def _init():
            m_ref[...] = jnp.full(m_ref.shape, -jnp.inf, m_ref.dtype)
            # g*_ref need no init: the t==0 update is forced below.

        f32 = jnp.float32
        w = w_ref[...]
        x0 = x0_ref[...]
        x1 = x1_ref[...]
        x2 = x2_ref[...]
        x0f = x0.astype(f32)
        x1f = x1.astype(f32)
        x2f = x2.astype(f32)

        # d_k = W @ x_k on the MXU (f32 accumulation);
        # dot[c, n] = sum_k x_k[c, n] * d_k[c, n]
        dot = (x0f * jnp.dot(w, x0, preferred_element_type=f32)
               + x1f * jnp.dot(w, x1, preferred_element_type=f32)
               + x2f * jnp.dot(w, x2, preferred_element_type=f32))

        C, TN = dot.shape
        iota = jax.lax.broadcasted_iota(jnp.int32, (C, TN), 1)

        if needs_mask:
            # Padded lanes (global point index >= true N) never win the argmax.
            start = (s * tiles_per_split + t) * tn
            dot = jnp.where((iota + start) < n_valid, dot, -jnp.inf)

        # Within-tile argmax (first occurrence on ties) as a boolean mask.
        tile_max = jnp.max(dot, axis=-1, keepdims=True)                # [C, 1]
        tidx = jnp.min(jnp.where(dot >= tile_max, iota, TN),
                       axis=-1, keepdims=True)                         # [C, 1]
        mask = iota == tidx                                            # [C, TN]

        # Gather each vector component at the tile argmax: boolean select +
        # lane reduction (exactly one non-zero per row -> exact in any dtype).
        zero = jnp.zeros((), x0.dtype)
        g0 = jnp.sum(jnp.where(mask, x0, zero), axis=-1, keepdims=True, dtype=f32)
        g1 = jnp.sum(jnp.where(mask, x1, zero), axis=-1, keepdims=True, dtype=f32)
        g2 = jnp.sum(jnp.where(mask, x2, zero), axis=-1, keepdims=True, dtype=f32)

        # Online merge.  Strict '>' keeps the earliest tile on exact ties
        # (torch.argmax first-occurrence); the t==0 term guarantees a valid
        # pick even if every dot is -inf.
        upd = jnp.logical_or(tile_max > m_ref[...], t == 0)
        m_ref[...] = jnp.where(upd, tile_max, m_ref[...])
        g0_ref[...] = jnp.where(upd, g0, g0_ref[...])
        g1_ref[...] = jnp.where(upd, g1, g1_ref[...])
        g2_ref[...] = jnp.where(upd, g2, g2_ref[...])

        # Emit the outputs once per (batch, split).
        @pl.when(t == pl.num_programs(2) - 1)
        def _finish():
            o_ref[...] = jnp.concatenate(
                [g0_ref[...], g1_ref[...], g2_ref[...]], axis=-1
            ).astype(o_ref.dtype)
            md_ref[...] = m_ref[...]

    return kernel


def _vmem_capacity_bytes():
    try:
        return int(pltpu.get_tpu_info().vmem_capacity_bytes)
    except Exception:
        return 64 << 20          # conservative (v7x physical VMEM)


def _pick_n_tile(c_pad, N, itemsize, w_bytes, max_tile=8192):
    """Largest lane tile (multiple of 128) whose double-buffered triple-k
    input footprint (plus the double-buffered W and ~1 MiB headroom) fits the
    generation-aware VMEM budget.  Returns (tile, vmem_limit_bytes)."""
    cap = _vmem_capacity_bytes()
    vmem_limit = min(cap // 2, 64 << 20)       # v7x: 32 MiB, v5e/v6e: 64 MiB
    budget = int(vmem_limit * 0.7) - 2 * w_bytes - (1 << 20)
    budget = max(budget, 1 << 20)
    per_lane = 3 * 2 * c_pad * itemsize        # 3 k-views, double buffered
    cap_lanes = max(128, (budget // per_lane) // 128 * 128)
    n128 = -(-N // 128) * 128
    tn = max(128, min(cap_lanes, max_tile, n128) // 128 * 128)
    return tn, vmem_limit


def vn_max_pool(x, w, *, n_tile=None, n_splits=None):
    """x: [B, C, 3, N] (f32 or bf16), w: [C, C] (nn.Linear weight, out x in).

    Returns the vector-neuron max pool, shape [B, C, 3], dtype of x.
    """
    B, C, K, N = x.shape
    assert K == 3
    w = w.astype(x.dtype)

    itemsize = jnp.dtype(x.dtype).itemsize
    c_pad = -(-C // 8) * 8
    w_bytes = c_pad * c_pad * jnp.dtype(w.dtype).itemsize
    tn_auto, vmem_limit = _pick_n_tile(c_pad, N, itemsize, w_bytes)
    n128 = -(-N // 128) * 128

    if n_tile is not None:
        tn = n_tile
    else:
        tn = tn_auto
        if B == 1 and n128 >= 256:
            # Keep >= 2 tiles so the N axis can be split across TensorCores.
            tn = min(tn, (n128 // 2) // 128 * 128)
    assert tn % 128 == 0 and tn >= 128
    tn = min(tn, n128)

    num_tiles = -(-N // tn)
    if n_splits is None:
        n_splits = 2 if (B == 1 and num_tiles >= 2) else 1
    S = n_splits
    T = -(-num_tiles // S)                    # tiles per split
    total = S * T                             # tiles per k-slice
    n_pad = total * tn

    if n_pad != N:
        x = jnp.pad(x, ((0, 0), (0, 0), (0, 0), (0, n_pad - N)))
    x2d = x.reshape(B, C, K * n_pad)          # contiguous merge -> free

    kernel = _make_kernel(N, tn, T, needs_mask=(n_pad != N))

    def xmap(k):
        # Three lane-offset views of the SAME [B, C, 3*n_pad] buffer.
        return lambda b, s, t, k=k: (b, 0, k * total + s * T + t)

    out_p, md_p = pl.pallas_call(
        kernel,
        out_shape=(jax.ShapeDtypeStruct((B, S, C, K), x.dtype),
                   jax.ShapeDtypeStruct((B, S, C, 1), jnp.float32)),
        grid=(B, S, T),
        in_specs=[pl.BlockSpec((None, C, tn), xmap(0)),
                  pl.BlockSpec((None, C, tn), xmap(1)),
                  pl.BlockSpec((None, C, tn), xmap(2)),
                  pl.BlockSpec((C, C), lambda b, s, t: (0, 0))],
        out_specs=(pl.BlockSpec((None, None, C, K), lambda b, s, t: (b, s, 0, 0)),
                   pl.BlockSpec((None, None, C, 1), lambda b, s, t: (b, s, 0, 0))),
        scratch_shapes=[pltpu.VMEM((C, 1), jnp.float32)] * 4,
        compiler_params=pltpu.CompilerParams(
            dimension_semantics=("parallel", "parallel", "arbitrary"),
            vmem_limit_bytes=vmem_limit,
        ),
    )(x2d, x2d, x2d, w)

    if S == 1:
        return out_p[:, 0]
    # Tiny epilogue merging the per-split partials (argmax over splits picks
    # the earliest split on ties -> first-occurrence semantics preserved).
    best = jnp.argmax(md_p[..., 0], axis=1)                 # [B, C]
    out = jnp.take_along_axis(out_p, best[:, None, :, None], axis=1)
    return out[:, 0]


def vn_max_pool_ref(x, w):
    xf = x.astype(jnp.float32)
    wf = w.astype(x.dtype).astype(jnp.float32)
    d = jnp.einsum('cj,bjkn->bckn', wf, xf,
                   precision=jax.lax.Precision.HIGHEST)
    dot = (xf * d).sum(axis=2)                     # [B, C, N]
    idx = jnp.argmax(dot, axis=-1)                 # [B, C]
    return jnp.take_along_axis(x, idx[:, :, None, None], axis=-1)[..., 0]


if __name__ == "__main__":
    key = jax.random.PRNGKey(0)
    k1, k2, k3, k4, k5, k6 = jax.random.split(key, 6)
    K = 3

    # Case 1: module-sized small input (B=2, C=4, N=16) -> padded/masked tile.
    B, C, N = 2, 4, 16
    x = jax.random.normal(k1, (B, C, K, N), dtype=jnp.float32)
    w = jax.random.normal(k2, (C, C), dtype=jnp.float32) / jnp.sqrt(C)
    out = vn_max_pool(x, w)
    jax.block_until_ready(out)
    assert out.shape == (B, C, K)
    assert jnp.allclose(out, vn_max_pool_ref(x, w), atol=1e-5, rtol=1e-5)

    # Case 2: B=1 -> N tiles split across two "parallel" groups (both cores on
    # v7x) + tiny JAX merge epilogue; 384 points padded to 512 (masked lanes).
    B2, C2, N2 = 1, 12, 384
    x2 = jax.random.normal(k3, (B2, C2, K, N2), dtype=jnp.float32)
    w2 = jax.random.normal(k4, (C2, C2), dtype=jnp.float32) / jnp.sqrt(C2)
    out2 = vn_max_pool(x2, w2, n_tile=128)
    jax.block_until_ready(out2)
    assert out2.shape == (B2, C2, K)
    assert jnp.allclose(out2, vn_max_pool_ref(x2, w2), atol=1e-5, rtol=1e-5)

    # Case 3: bf16 input path (halved HBM traffic; gather is exact in bf16).
    B3, C3, N3 = 2, 8, 256
    x3 = jax.random.normal(k5, (B3, C3, K, N3), dtype=jnp.float32).astype(jnp.bfloat16)
    w3 = (jax.random.normal(k6, (C3, C3), dtype=jnp.float32)
          / jnp.sqrt(C3)).astype(jnp.bfloat16)
    out3 = vn_max_pool(x3, w3)
    jax.block_until_ready(out3)
    assert out3.shape == (B3, C3, K)
    assert jnp.allclose(out3.astype(jnp.float32),
                        vn_max_pool_ref(x3, w3).astype(jnp.float32),
                        atol=1e-2, rtol=1e-2)

    print("KERNEL_OK")
</pallas_src>

<mosaic_0001>
module attributes {stable_mosaic.version = 11 : i64} {
  func.func @kernel(%arg0: i32, %arg1: i32, %arg2: i32, %arg3: memref<1x4x128xf32, #tpu.memory_space<vmem>>, %arg4: memref<1x4x128xf32, #tpu.memory_space<vmem>>, %arg5: memref<1x4x128xf32, #tpu.memory_space<vmem>>, %arg6: memref<4x4xf32, #tpu.memory_space<vmem>>, %arg7: memref<1x1x4x3xf32, #tpu.memory_space<vmem>>, %arg8: memref<1x1x4x1xf32, #tpu.memory_space<vmem>>, %arg9: memref<4x1xf32, #tpu.memory_space<vmem>>, %arg10: memref<4x1xf32, #tpu.memory_space<vmem>>, %arg11: memref<4x1xf32, #tpu.memory_space<vmem>>, %arg12: memref<4x1xf32, #tpu.memory_space<vmem>>) attributes {dimension_semantics = [#tpu.dimension_semantics<parallel>, #tpu.dimension_semantics<parallel>, #tpu.dimension_semantics<arbitrary>], iteration_bounds = array<i64: 2, 1, 1>, scalar_prefetch = 0 : i64, scratch_operands = 4 : i64, tpu.core_type = #tpu.core_type<tc>, window_params = [{transform_indices = @transform_0, window_bounds = array<i64: 1, 4, 128>}, {transform_indices = @transform_1, window_bounds = array<i64: 1, 4, 128>}, {transform_indices = @transform_2, window_bounds = array<i64: 1, 4, 128>}, {pipeline_mode = #tpu.pipeline_mode<synchronous>, transform_indices = @transform_3, window_bounds = array<i64: 4, 4>}, {transform_indices = @transform_4, window_bounds = array<i64: 1, 1, 4, 3>}, {transform_indices = @transform_5, window_bounds = array<i64: 1, 1, 4, 1>}]} {
    %c0_i32 = arith.constant 0 : i32
    %0 = arith.cmpi eq, %arg2, %c0_i32 : i32
    %1 = arith.extui %0 : i1 to i32
    %c0_i32_0 = arith.constant 0 : i32
    %2 = arith.cmpi ne, %1, %c0_i32_0 : i32
    scf.if %2 {
      %cst_44 = arith.constant 0xFF800000 : f32
      %70 = vector.broadcast %cst_44 : f32 to vector<4x1xf32>
      %c0_45 = arith.constant 0 : index
      %c0_46 = arith.constant 0 : index
      %71 = vector.load %arg9[%c0_45, %c0_46] : memref<4x1xf32, #tpu.memory_space<vmem>>, vector<4x1xf32>
      tpu.vector_store %arg9[%c0_45, %c0_46], %70 {strides = array<i32>} : memref<4x1xf32, #tpu.memory_space<vmem>>, vector<4x1xf32>,
    } else {
    }
    %c0 = arith.constant 0 : index
    %c0_1 = arith.constant 0 : index
    %3 = vector.load %arg6[%c0, %c0_1] : memref<4x4xf32, #tpu.memory_space<vmem>>, vector<4x4xf32>
    %c0_2 = arith.constant 0 : index
    %c0_3 = arith.constant 0 : index
    %c0_4 = arith.constant 0 : index
    %4 = vector.load %arg3[%c0_2, %c0_3, %c0_4] : memref<1x4x128xf32, #tpu.memory_space<vmem>>, vector<1x4x128xf32>
    %5 = vector.shape_cast %4 : vector<1x4x128xf32> to vector<4x128xf32>
    %c0_5 = arith.constant 0 : index
    %c0_6 = arith.constant 0 : index
    %c0_7 = arith.constant 0 : index
    %6 = vector.load %arg4[%c0_5, %c0_6, %c0_7] : memref<1x4x128xf32, #tpu.memory_space<vmem>>, vector<1x4x128xf32>
    %7 = vector.shape_cast %6 : vector<1x4x128xf32> to vector<4x128xf32>
    %c0_8 = arith.constant 0 : index
    %c0_9 = arith.constant 0 : index
    %c0_10 = arith.constant 0 : index
    %8 = vector.load %arg5[%c0_8, %c0_9, %c0_10] : memref<1x4x128xf32, #tpu.memory_space<vmem>>, vector<1x4x128xf32>
    %9 = vector.shape_cast %8 : vector<1x4x128xf32> to vector<4x128xf32>
    %cst = arith.constant dense<0.000000e+00> : vector<4x128xf32>
    %10 = tpu.matmul %3, %5, %cst {dimension_numbers = #tpu.dot_dimension_numbers<[1], [0], [0], [1], [0, 0, 1, 1], [], []>} : vector<4x4xf32>, vector<4x128xf32>, vector<4x128xf32> -> vector<4x128xf32>
    %11 = arith.mulf %5, %10 : vector<4x128xf32>
    %cst_11 = arith.constant dense<0.000000e+00> : vector<4x128xf32>
    %12 = tpu.matmul %3, %7, %cst_11 {dimension_numbers = #tpu.dot_dimension_numbers<[1], [0], [0], [1], [0, 0, 1, 1], [], []>} : vector<4x4xf32>, vector<4x128xf32>, vector<4x128xf32> -> vector<4x128xf32>
    %13 = arith.mulf %7, %12 : vector<4x128xf32>
    %14 = arith.addf %11, %13 : vector<4x128xf32>
    %cst_12 = arith.constant dense<0.000000e+00> : vector<4x128xf32>
    %15 = tpu.matmul %3, %9, %cst_12 {dimension_numbers = #tpu.dot_dimension_numbers<[1], [0], [0], [1], [0, 0, 1, 1], [], []>} : vector<4x4xf32>, vector<4x128xf32>, vector<4x128xf32> -> vector<4x128xf32>
    %16 = arith.mulf %9, %15 : vector<4x128xf32>
    %17 = arith.addf %14, %16 : vector<4x128xf32>
    %18 = tpu.iota {dimensions = array<i32: 1>} : vector<4x128xi32>
    %c1_i32 = arith.constant 1 : i32
    %19 = arith.muli %arg1, %c1_i32 : i32
    %20 = arith.addi %19, %arg2 : i32
    %c128_i32 = arith.constant 128 : i32
    %21 = arith.muli %20, %c128_i32 : i32
    %22 = vector.broadcast %21 : i32 to vector<4x128xi32>
    %23 = arith.addi %18, %22 : vector<4x128xi32>
    %c16_i32 = arith.constant 16 : i32
    %24 = vector.broadcast %c16_i32 : i32 to vector<4x128xi32>
    %25 = arith.cmpi slt, %23, %24 : vector<4x128xi32>
    %cst_13 = arith.constant 0xFF800000 : f32
    %26 = vector.broadcast %cst_13 : f32 to vector<4x128xf32>
    %27 = arith.select %25, %17, %26 : vector<4x128xi1>, vector<4x128xf32>
    %cst_14 = arith.constant dense<0xFF800000> : vector<4xf32>
    %28 = vector.multi_reduction <maximumf>, %27, %cst_14 [1] : vector<4x128xf32> to vector<4xf32>
    %29 = vector.shape_cast %28 : vector<4xf32> to vector<4x1xf32>
    %30 = vector.broadcast %29 : vector<4x1xf32> to vector<4x128xf32>
    %31 = arith.cmpf oge, %27, %30 : vector<4x128xf32>
    %c128_i32_15 = arith.constant 128 : i32
    %32 = vector.broadcast %c128_i32_15 : i32 to vector<4x128xi32>
    %33 = arith.select %31, %18, %32 : vector<4x128xi1>, vector<4x128xi32>
    %cst_16 = arith.constant dense<2147483647> : vector<4xi32>
    %34 = vector.multi_reduction <minsi>, %33, %cst_16 [1] : vector<4x128xi32> to vector<4xi32>
    %35 = vector.shape_cast %34 : vector<4xi32> to vector<4x1xi32>
    %36 = vector.broadcast %35 : vector<4x1xi32> to vector<4x128xi32>
    %37 = arith.cmpi eq, %18, %36 : vector<4x128xi32>
    %cst_17 = arith.constant 0.000000e+00 : f32
    %38 = vector.broadcast %cst_17 : f32 to vector<4x128xf32>
    %39 = arith.select %37, %5, %38 : vector<4x128xi1>, vector<4x128xf32>
    %cst_18 = arith.constant dense<0.000000e+00> : vector<4xf32>
    %40 = vector.multi_reduction <add>, %39, %cst_18 [1] : vector<4x128xf32> to vector<4xf32>
    %41 = vector.shape_cast %40 : vector<4xf32> to vector<4x1xf32>
    %cst_19 = arith.constant 0.000000e+00 : f32
    %42 = vector.broadcast %cst_19 : f32 to vector<4x128xf32>
    %43 = arith.select %37, %7, %42 : vector<4x128xi1>, vector<4x128xf32>
    %cst_20 = arith.constant dense<0.000000e+00> : vector<4xf32>
    %44 = vector.multi_reduction <add>, %43, %cst_20 [1] : vector<4x128xf32> to vector<4xf32>
    %45 = vector.shape_cast %44 : vector<4xf32> to vector<4x1xf32>
    %cst_21 = arith.constant 0.000000e+00 : f32
    %46 = vector.broadcast %cst_21 : f32 to vector<4x128xf32>
    %47 = arith.select %37, %9, %46 : vector<4x128xi1>, vector<4x128xf32>
    %cst_22 = arith.constant dense<0.000000e+00> : vector<4xf32>
    %48 = vector.multi_reduction <add>, %47, %cst_22 [1] : vector<4x128xf32> to vector<4xf32>
    %49 = vector.shape_cast %48 : vector<4xf32> to vector<4x1xf32>
    %c0_23 = arith.constant 0 : index
    %c0_24 = arith.constant 0 : index
    %50 = vector.load %arg9[%c0_23, %c0_24] : memref<4x1xf32, #tpu.memory_space<vmem>>, vector<4x1xf32>
    %51 = arith.cmpf ogt, %29, %50 : vector<4x1xf32>
    %c0_i32_25 = arith.constant 0 : i32
    %52 = arith.cmpi eq, %arg2, %c0_i32_25 : i32
    %53 = vector.broadcast %52 : i1 to vector<4x1xi1>
    %54 = arith.ori %51, %53 : vector<4x1xi1>
    %c0_26 = arith.constant 0 : index
    %c0_27 = arith.constant 0 : index
    %55 = vector.load %arg9[%c0_26, %c0_27] : memref<4x1xf32, #tpu.memory_space<vmem>>, vector<4x1xf32>
    %56 = arith.select %54, %29, %55 : vector<4x1xi1>, vector<4x1xf32>
    %c0_28 = arith.constant 0 : index
    %c0_29 = arith.constant 0 : index
    %57 = vector.load %arg9[%c0_28, %c0_29] : memref<4x1xf32, #tpu.memory_space<vmem>>, vector<4x1xf32>
    tpu.vector_store %arg9[%c0_28, %c0_29], %56 {strides = array<i32>} : memref<4x1xf32, #tpu.memory_space<vmem>>, vector<4x1xf32>,
    %c0_30 = arith.constant 0 : index
    %c0_31 = arith.constant 0 : index
    %58 = vector.load %arg10[%c0_30, %c0_31] : memref<4x1xf32, #tpu.memory_space<vmem>>, vector<4x1xf32>
    %59 = arith.select %54, %41, %58 : vector<4x1xi1>, vector<4x1xf32>
    %c0_32 = arith.constant 0 : index
    %c0_33 = arith.constant 0 : index
    %60 = vector.load %arg10[%c0_32, %c0_33] : memref<4x1xf32, #tpu.memory_space<vmem>>, vector<4x1xf32>
    tpu.vector_store %arg10[%c0_32, %c0_33], %59 {strides = array<i32>} : memref<4x1xf32, #tpu.memory_space<vmem>>, vector<4x1xf32>,
    %c0_34 = arith.constant 0 : index
    %c0_35 = arith.constant 0 : index
    %61 = vector.load %arg11[%c0_34, %c0_35] : memref<4x1xf32, #tpu.memory_space<vmem>>, vector<4x1xf32>
    %62 = arith.select %54, %45, %61 : vector<4x1xi1>, vector<4x1xf32>
    %c0_36 = arith.constant 0 : index
    %c0_37 = arith.constant 0 : index
    %63 = vector.load %arg11[%c0_36, %c0_37] : memref<4x1xf32, #tpu.memory_space<vmem>>, vector<4x1xf32>
    tpu.vector_store %arg11[%c0_36, %c0_37], %62 {strides = array<i32>} : memref<4x1xf32, #tpu.memory_space<vmem>>, vector<4x1xf32>,
    %c0_38 = arith.constant 0 : index
    %c0_39 = arith.constant 0 : index
    %64 = vector.load %arg12[%c0_38, %c0_39] : memref<4x1xf32, #tpu.memory_space<vmem>>, vector<4x1xf32>
    %65 = arith.select %54, %49, %64 : vector<4x1xi1>, vector<4x1xf32>
    %c0_40 = arith.constant 0 : index
    %c0_41 = arith.constant 0 : index
    %66 = vector.load %arg12[%c0_40, %c0_41] : memref<4x1xf32, #tpu.memory_space<vmem>>, vector<4x1xf32>
    tpu.vector_store %arg12[%c0_40, %c0_41], %65 {strides = array<i32>} : memref<4x1xf32, #tpu.memory_space<vmem>>, vector<4x1xf32>,
    %c0_i32_42 = arith.constant 0 : i32
    %67 = arith.cmpi eq, %arg2, %c0_i32_42 : i32
    %68 = arith.extui %67 : i1 to i32
    %c0_i32_43 = arith.constant 0 : i32
    %69 = arith.cmpi ne, %68, %c0_i32_43 : i32
    scf.if %69 {
      %c0_44 = arith.constant 0 : index
      %c0_45 = arith.constant 0 : index
      %70 = vector.load %arg10[%c0_44, %c0_45] : memref<4x1xf32, #tpu.memory_space<vmem>>, vector<4x1xf32>
      %c0_46 = arith.constant 0 : index
      %c0_47 = arith.constant 0 : index
      %71 = vector.load %arg11[%c0_46, %c0_47] : memref<4x1xf32, #tpu.memory_space<vmem>>, vector<4x1xf32>
      %c0_48 = arith.constant 0 : index
      %c0_49 = arith.constant 0 : index
      %72 = vector.load %arg12[%c0_48, %c0_49] : memref<4x1xf32, #tpu.memory_space<vmem>>, vector<4x1xf32>
      %73 = tpu.concatenate %70, %71, %72 in 1 : vector<4x1xf32>, vector<4x1xf32>, vector<4x1xf32> -> vector<4x3xf32>
      %c0_50 = arith.constant 0 : index
      %c0_51 = arith.constant 0 : index
      %c0_52 = arith.constant 0 : index
      %c0_53 = arith.constant 0 : index
      %74 = vector.load %arg7[%c0_50, %c0_51, %c0_52, %c0_53] : memref<1x1x4x3xf32, #tpu.memory_space<vmem>>, vector<1x1x4x3xf32>
      %75 = vector.shape_cast %74 : vector<1x1x4x3xf32> to vector<4x3xf32>
      %76 = vector.shape_cast %73 : vector<4x3xf32> to vector<1x1x4x3xf32>
      tpu.vector_store %arg7[%c0_50, %c0_51, %c0_52, %c0_53], %76 {strides = array<i32>} : memref<1x1x4x3xf32, #tpu.memory_space<vmem>>, vector<1x1x4x3xf32>,
      %c0_54 = arith.constant 0 : index
      %c0_55 = arith.constant 0 : index
      %77 = vector.load %arg9[%c0_54, %c0_55] : memref<4x1xf32, #tpu.memory_space<vmem>>, vector<4x1xf32>
      %c0_56 = arith.constant 0 : index
      %c0_57 = arith.constant 0 : index
      %c0_58 = arith.constant 0 : index
      %c0_59 = arith.constant 0 : index
      %78 = vector.load %arg8[%c0_56, %c0_57, %c0_58, %c0_59] : memref<1x1x4x1xf32, #tpu.memory_space<vmem>>, vector<1x1x4x1xf32>
      %79 = vector.shape_cast %78 : vector<1x1x4x1xf32> to vector<4x1xf32>
      %80 = vector.shape_cast %77 : vector<4x1xf32> to vector<1x1x4x1xf32>
      tpu.vector_store %arg8[%c0_56, %c0_57, %c0_58, %c0_59], %80 {strides = array<i32>} : memref<1x1x4x1xf32, #tpu.memory_space<vmem>>, vector<1x1x4x1xf32>,
    } else {
    }
    return
  }
  func.func @transform_0(%arg0: i32, %arg1: i32, %arg2: i32) -> (i32, i32, i32) {
    %c1_i32 = arith.constant 1 : i32
    %0 = arith.muli %arg1, %c1_i32 : i32
    %c0_i32 = arith.constant 0 : i32
    %1 = arith.addi %c0_i32, %0 : i32
    %2 = arith.addi %1, %arg2 : i32
    %c0_i32_0 = arith.constant 0 : i32
    %c0_i32_1 = arith.constant 0 : i32
    return %arg0, %c0_i32_0, %2 : i32, i32, i32
  }
  func.func @transform_1(%arg0: i32, %arg1: i32, %arg2: i32) -> (i32, i32, i32) {
    %c1_i32 = arith.constant 1 : i32
    %0 = arith.muli %arg1, %c1_i32 : i32
    %c1_i32_0 = arith.constant 1 : i32
    %1 = arith.addi %c1_i32_0, %0 : i32
    %2 = arith.addi %1, %arg2 : i32
    %c0_i32 = arith.constant 0 : i32
    %c0_i32_1 = arith.constant 0 : i32
    return %arg0, %c0_i32, %2 : i32, i32, i32
  }
  func.func @transform_2(%arg0: i32, %arg1: i32, %arg2: i32) -> (i32, i32, i32) {
    %c1_i32 = arith.constant 1 : i32
    %0 = arith.muli %arg1, %c1_i32 : i32
    %c2_i32 = arith.constant 2 : i32
    %1 = arith.addi %c2_i32, %0 : i32
    %2 = arith.addi %1, %arg2 : i32
    %c0_i32 = arith.constant 0 : i32
    %c0_i32_0 = arith.constant 0 : i32
    return %arg0, %c0_i32, %2 : i32, i32, i32
  }
  func.func @transform_3(%arg0: i32, %arg1: i32, %arg2: i32) -> (i32, i32) {
    %c0_i32 = arith.constant 0 : i32
    %c0_i32_0 = arith.constant 0 : i32
    %c0_i32_1 = arith.constant 0 : i32
    return %c0_i32, %c0_i32_0 : i32, i32
  }
  func.func @transform_4(%arg0: i32, %arg1: i32, %arg2: i32) -> (i32, i32, i32, i32) {
    %c0_i32 = arith.constant 0 : i32
    %c0_i32_0 = arith.constant 0 : i32
    %c0_i32_1 = arith.constant 0 : i32
    return %arg0, %arg1, %c0_i32, %c0_i32_0 : i32, i32, i32, i32
  }
  func.func @transform_5(%arg0: i32, %arg1: i32, %arg2: i32) -> (i32, i32, i32, i32) {
    %c0_i32 = arith.constant 0 : i32
    %c0_i32_0 = arith.constant 0 : i32
    %c0_i32_1 = arith.constant 0 : i32
    return %arg0, %arg1, %c0_i32, %c0_i32_0 : i32, i32, i32, i32
  }
}

</mosaic_0001>

<llo_original>
// kernel: tpu_custom_call.1
$region0: #{tpu_custom_call.1}
  #allocation0 [shape = 'u32[]', space=smem, size = 0x4, offset = 0x4, fixed_abs, tag = 'smem constant byte address 0x4 - core index']
  #allocation1 [shape = 'u32[144,128]{1,0:T(1,128)}', space=vmem, size = 0x12000, scoped, tag = 'internal scratch']
  #allocation2 [shape = 'f32[4,1]{1,0:T(4,128)}', space=vmem, size = 0x800, scoped, tag = 'scratch operand']
  #allocation3 [shape = 'f32[4,1]{1,0:T(4,128)}', space=vmem, size = 0x800, scoped, tag = 'scratch operand']
  #allocation4 [shape = 'f32[4,1]{1,0:T(4,128)}', space=vmem, size = 0x800, scoped, tag = 'scratch operand']
  #allocation5 [shape = 'f32[4,1]{1,0:T(4,128)}', space=vmem, size = 0x800, scoped, tag = 'scratch operand']
  %s0 = inlined_call_operand.hbm [shape: f32[2,4,384], index: 0, kind: input, shape index: {}]
  %s1 = inlined_call_operand.hbm [shape: f32[2,4,384], index: 1, kind: input, shape index: {}]
  %s2 = inlined_call_operand.hbm [shape: f32[2,4,384], index: 2, kind: input, shape index: {}]
  %s3 = inlined_call_operand.vmem [shape: f32[4,4], index: 3, kind: input, shape index: {}]
  %s4 = inlined_call_operand.vmem [shape: f32[2,1,4,3], index: 4, kind: output, shape index: {0}]
  %s5 = inlined_call_operand.vmem [shape: f32[2,1,4,1], index: 5, kind: output, shape index: {1}]
  %6 = xla_tuple %s4, %s5
  %s7 = sld [smem:[#allocation0]]
  $region77: #{tpu_custom_call.1} parent=0
    _
  %s9 = ssub.s32 1, %s7
  %s10 = scalar_select 0, %s9, %s7
  $region1: #{tpu_custom_call.1} parent=0
    #allocation6 [shape = 'u8[4096]{0}', space=vmem, size = 0x1000, scoped, tag = 'input window, operand 0']
    #allocation7 [shape = 's32[2]{0}', space=sflag, size = 0x8, scoped, tag = 'scoped memory for tpu_custom_call.1']
    #allocation8 [shape = 'u8[4096]{0}', space=vmem, size = 0x1000, scoped, tag = 'input window, operand 1']
    #allocation9 [shape = 's32[2]{0}', space=sflag, size = 0x8, scoped, tag = 'scoped memory for tpu_custom_call.1']
    #allocation10 [shape = 'u8[4096]{0}', space=vmem, size = 0x1000, scoped, tag = 'input window, operand 2']
    %11 = vsyncpa [#allocation7], 0
    %s12 = scalar_lea.sflag [#allocation7], 1
    %13 = vsyncpa %s12, 0
    %14 = vsyncpa [#allocation9], 0
    %s15 = scalar_lea.sflag [#allocation9], 1
    %16 = vsyncpa %s15, 0
    loop: start=0, step=1, limit=4
    $region2: #{tpu_custom_call.1} parent=1 // loop_pre_header
      _
    $region3: #{tpu_custom_call.1} parent=1 // loop_header
      %s18 = sphi 0, %s22
      %p19 = scmp.ge.s32.totalorder %s18, 4
      %s25 = sphi 0, %s44
      %s26 = sphi 0, %s40
      %s27 = sphi 0, %s36
      %s28 = sphi 0, %s25
      %s29 = sphi 0, %s26
      %s30 = sphi 0, %s27
      %s31 = sphi 0, %s28
      %s32 = sphi 0, %s29
      %s33 = sphi 0, %s30
      %s51 = sphi 0, %s53
      %s54 = sphi 0, %s51
      %s55 = sphi 0, %s54
      %s71 = sphi 0, %s55
      %s83 = sphi 0, %s85
      %s86 = sphi 0, %s83
      %s87 = sphi 0, %s86
      %s103 = sphi 0, %s87
      %s115 = sphi 0, %s117
      %s118 = sphi 0, %s115
      %s119 = sphi 0, %s118
      %s135 = sphi 0, %s119
      %s139 = sphi 0, %s139
      %s141 = sphi 0, %s139
      %s142 = sphi 0, %s141
      %s156 = sphi 0, %s142
      %s164 = sphi 0, %s166
      %s167 = sphi 0, %s164
      %s168 = sphi 0, %s167
      %s184 = sphi 0, %s168
      %s192 = sphi 0, %s194
      %s195 = sphi 0, %s192
      %s196 = sphi 0, %s195
      %s212 = sphi 0, %s196
    $region4: #{tpu_custom_call.1} parent=1 // loop_header_branch
      %21 = sbr.rel (%p19) target = $region8
    $region5: #{tpu_custom_call.1} parent=1 // loop_body
      %s23 = ssub.s32 %s18, 1
      %s24 = ssub.s32 %s18, 2
      %s34 = sadd.s32 1, %s27
      %p35 = scmp.ge.s32.totalorder %s34, 1
      %s36 = scalar_select %p35, 0, %s34
      %s37 = sadd.s32 1, %s26
      %s38 = scalar_select %p35, %s37, %s26
      %p39 = scmp.ge.s32.totalorder %s38, 1
      %s40 = scalar_select %p39, 0, %s38
      %s41 = sadd.s32 1, %s25
      %s42 = scalar_select %p39, %s41, %s25
      %p43 = scmp.ge.s32.totalorder %s42, 2
      %s44 = scalar_select %p43, 0, %s42
      %s45 = sadd.s32 %s26, %s27
      %s46 = sadd.s32 %s40, %s36
      %s47 = ssub.s32 %s25, %s44
      %s48 = ssub.s32 %s45, %s46
      %s49 = sor.u32 %s47, %s48
      %p50 = scmp.eq.s32.totalorder %s49, 0
      %s52 = sadd.s32 %s51, 1
      %s53 = scalar_select %p50, %s51, %s52
      %p56 = pneg %p50
      %p57 = scmp.eq.s32.totalorder %s18, 1
      %p58 = por %p56, %p57
      %p59 = scmp.ne.s32.totalorder %s51, %s54
      %p60 = scmp.eq.s32.totalorder %s18, 0
      %p61 = por %p59, %p60
      %p62 = scmp.ne.s32.totalorder %s51, %s54
      %p63 = scmp.eq.s32.totalorder %s23, 1
      %p64 = por %p62, %p63
      %p65 = scmp.ne.s32.totalorder %s54, %s55
      %p66 = scmp.eq.s32.totalorder %s23, 0
      %p67 = por %p65, %p66
      %p68 = scmp.ne.s32.totalorder %s54, %s55
      %p69 = scmp.eq.s32.totalorder %s24, 1
      %p70 = por %p68, %p69
      %p72 = scmp.ne.s32.totalorder %s55, %s71
      %p73 = scmp.eq.s32.totalorder %s24, 0
      %p74 = por %p72, %p73
      %s75 = sadd.s32 %s26, 1
      %s76 = sadd.s32 %s75, %s27
      %s77 = sadd.s32 %s40, 1
      %s78 = sadd.s32 %s77, %s36
      %s79 = ssub.s32 %s25, %s44
      %s80 = ssub.s32 %s76, %s78
      %s81 = sor.u32 %s79, %s80
      %p82 = scmp.eq.s32.totalorder %s81, 0
      %s84 = sadd.s32 %s83, 1
      %s85 = scalar_select %p82, %s83, %s84
      %p88 = pneg %p82
      %p89 = scmp.eq.s32.totalorder %s18, 1
      %p90 = por %p88, %p89
      %p91 = scmp.ne.s32.totalorder %s83, %s86
      %p92 = scmp.eq.s32.totalorder %s18, 0
      %p93 = por %p91, %p92
      %p94 = scmp.ne.s32.totalorder %s83, %s86
      %p95 = scmp.eq.s32.totalorder %s23, 1
      %p96 = por %p94, %p95
      %p97 = scmp.ne.s32.totalorder %s86, %s87
      %p98 = scmp.eq.s32.totalorder %s23, 0
      %p99 = por %p97, %p98
      %p100 = scmp.ne.s32.totalorder %s86, %s87
      %p101 = scmp.eq.s32.totalorder %s24, 1
      %p102 = por %p100, %p101
      %p104 = scmp.ne.s32.totalorder %s87, %s103
      %p105 = scmp.eq.s32.totalorder %s24, 0
      %p106 = por %p104, %p105
      %s107 = sadd.s32 %s26, 2
      %s108 = sadd.s32 %s107, %s27
      %s109 = sadd.s32 %s40, 2
      %s110 = sadd.s32 %s109, %s36
      %s111 = ssub.s32 %s25, %s44
      %s112 = ssub.s32 %s108, %s110
      %s113 = sor.u32 %s111, %s112
      %p114 = scmp.eq.s32.totalorder %s113, 0
      %s116 = sadd.s32 %s115, 1
      %s117 = scalar_select %p114, %s115, %s116
      %p120 = pneg %p114
      %p121 = scmp.eq.s32.totalorder %s18, 1
      %p122 = por %p120, %p121
      %p123 = scmp.ne.s32.totalorder %s115, %s118
      %p124 = scmp.eq.s32.totalorder %s18, 0
      %p125 = por %p123, %p124
      %p126 = scmp.ne.s32.totalorder %s115, %s118
      %p127 = scmp.eq.s32.totalorder %s23, 1
      %p128 = por %p126, %p127
      %p129 = scmp.ne.s32.totalorder %s118, %s119
      %p130 = scmp.eq.s32.totalorder %s23, 0
      %p131 = por %p129, %p130
      %p132 = scmp.ne.s32.totalorder %s118, %s119
      %p133 = scmp.eq.s32.totalorder %s24, 1
      %p134 = por %p132, %p133
      %p136 = scmp.ne.s32.totalorder %s119, %s135
      %p137 = scmp.eq.s32.totalorder %s24, 0
      %p138 = por %p136, %p137
      %s140 = sadd.s32 %s139, 1
      %p143 = scmp.eq.s32.totalorder %s18, 1
      %p144 = scmp.ne.s32.totalorder %s139, %s141
      %p145 = scmp.eq.s32.totalorder %s18, 0
      %p146 = por %p144, %p145
      %p147 = scmp.ne.s32.totalorder %s139, %s141
      %p148 = scmp.eq.s32.totalorder %s23, 1
      %p149 = por %p147, %p148
      %p150 = scmp.ne.s32.totalorder %s141, %s142
      %p151 = scmp.eq.s32.totalorder %s23, 0
      %p152 = por %p150, %p151
      %p153 = scmp.ne.s32.totalorder %s141, %s142
      %p154 = scmp.eq.s32.totalorder %s24, 1
      %p155 = por %p153, %p154
      %p157 = scmp.ne.s32.totalorder %s142, %s156
      %p158 = scmp.eq.s32.totalorder %s24, 0
      %p159 = por %p157, %p158
      %s160 = ssub.s32 %s25, %s44
      %s161 = ssub.s32 %s26, %s40
      %s162 = sor.u32 %s160, %s161
      %p163 = scmp.eq.s32.totalorder %s162, 0
      %s165 = sadd.s32 %s164, 1
      %s166 = scalar_select %p163, %s164, %s165
      %p169 = pneg %p163
      %p170 = scmp.eq.s32.totalorder %s18, 1
      %p171 = por %p169, %p170
      %p172 = scmp.ne.s32.totalorder %s164, %s167
      %p173 = scmp.eq.s32.totalorder %s18, 0
      %p174 = por %p172, %p173
      %p175 = scmp.ne.s32.totalorder %s164, %s167
      %p176 = scmp.eq.s32.totalorder %s23, 1
      %p177 = por %p175, %p176
      %p178 = scmp.ne.s32.totalorder %s167, %s168
      %p179 = scmp.eq.s32.totalorder %s23, 0
      %p180 = por %p178, %p179
      %p181 = scmp.ne.s32.totalorder %s167, %s168
      %p182 = scmp.eq.s32.totalorder %s24, 1
      %p183 = por %p181, %p182
      %p185 = scmp.ne.s32.totalorder %s168, %s184
      %p186 = scmp.eq.s32.totalorder %s24, 0
      %p187 = por %p185, %p186
      %s188 = ssub.s32 %s25, %s44
      %s189 = ssub.s32 %s26, %s40
      %s190 = sor.u32 %s188, %s189
      %p191 = scmp.eq.s32.totalorder %s190, 0
      %s193 = sadd.s32 %s192, 1
      %s194 = scalar_select %p191, %s192, %s193
      %p197 = pneg %p191
      %p198 = scmp.eq.s32.totalorder %s18, 1
      %p199 = por %p197, %p198
      %p200 = scmp.ne.s32.totalorder %s192, %s195
      %p201 = scmp.eq.s32.totalorder %s18, 0
      %p202 = por %p200, %p201
      %p203 = scmp.ne.s32.totalorder %s192, %s195
      %p204 = scmp.eq.s32.totalorder %s23, 1
      %p205 = por %p203, %p204
      %p206 = scmp.ne.s32.totalorder %s195, %s196
      %p207 = scmp.eq.s32.totalorder %s23, 0
      %p208 = por %p206, %p207
      %p209 = scmp.ne.s32.totalorder %s195, %s196
      %p210 = scmp.eq.s32.totalorder %s24, 1
      %p211 = por %p209, %p210
      %p213 = scmp.ne.s32.totalorder %s196, %s212
      %p214 = scmp.eq.s32.totalorder %s24, 0
      %p215 = por %p213, %p214
      %p216 = scmp.le.s32.totalorder 1, %s18
      %p217 = scmp.lt.s32.totalorder %s18, 3
      %p218 = pnand %p216, %p217
      %p219 = pneg %p218
      // Predicated region
      $region9: #{tpu_custom_call.1} parent=5 // pred_check
        _
      $region10: #{tpu_custom_call.1} parent=5 // pred_check_branch
        %221 = sbr.rel (%p218) target = $region12
      $region11: #{tpu_custom_call.1} parent=5 // pred_region
        %s222 = ssub.s32 %s18, 1
        // Predicated region
        $region13: #{tpu_custom_call.1} parent=11 // pred_check
          %p223 = pneg %p152
        $region14: #{tpu_custom_call.1} parent=11 // pred_check_branch
          %225 = sbr.rel (%p223) target = $region16
        $region15: #{tpu_custom_call.1} parent=11 // pred_region
          _
        $region16: #{tpu_custom_call.1} parent=11 // pred_fallthru
          _
      $region12: #{tpu_custom_call.1} parent=5 // pred_fallthru
        _
      %p226 = scmp.lt.s32.totalorder %s18, 2
      // Predicated region
      $region17: #{tpu_custom_call.1} parent=5 // pred_check
        %p227 = pneg %p226
      $region18: #{tpu_custom_call.1} parent=5 // pred_check_branch
        %229 = sbr.rel (%p227) target = $region20
      $region19: #{tpu_custom_call.1} parent=5 // pred_region
        // Predicated region
        $region21: #{tpu_custom_call.1} parent=19 // pred_check
          %p230 = pneg %p61
        $region22: #{tpu_custom_call.1} parent=19 // pred_check_branch
          %232 = sbr.rel (%p230) target = $region24
        $region23: #{tpu_custom_call.1} parent=19 // pred_region
          %s233 = sand.u32 %s51, 1
          %s234 = scalar_lea.sflag [#allocation7], %s233
          %s235 = sand.u32 %s51, 1
          %s236 = smul.addr %s235, 4
          %s237 = scalar_lea.vmem [#allocation6], %s236
          %s238 = sadd.s32 %s26, %s27
          %s240 = ssub.s32 64, 64
          %241 = vsyncadd %s234, %s240
          %s242 = smul.addr %s25, 3
          %s243 = sadd.s32 %s238, %s242
          %s244 = smul.addr %s243, 64
          %s245 = scalar_lea.hbm %s0, %s244
          %s247 = sshll.u32 %s237, 4
          %s248 = int_to_ptr.vmem [resolvable:$true] %s247
          %250 = dma.hbm_to_vmem [thread:$0]  %s245, 64, %s248, %s234
        $region24: #{tpu_custom_call.1} parent=19 // pred_fallthru
          _
        // Predicated region
        $region25: #{tpu_custom_call.1} parent=19 // pred_check
          %p251 = pneg %p93
        $region26: #{tpu_custom_call.1} parent=19 // pred_check_branch
          %253 = sbr.rel (%p251) target = $region28
        $region27: #{tpu_custom_call.1} parent=19 // pred_region
          %s254 = sand.u32 %s18, 1
          %s255 = scalar_lea.sflag [#allocation9], %s254
          %s256 = sand.u32 %s83, 1
          %s257 = smul.addr %s256, 4
          %s258 = scalar_lea.vmem [#allocation8], %s257
          %s259 = sadd.s32 %s26, 1
          %s260 = sadd.s32 %s259, %s27
          %s262 = ssub.s32 64, 64
          %263 = vsyncadd %s255, %s262
          %s264 = smul.addr %s25, 3
          %s265 = sadd.s32 %s260, %s264
          %s266 = smul.addr %s265, 64
          %s267 = scalar_lea.hbm %s1, %s266
          %s269 = sshll.u32 %s258, 4
          %s270 = int_to_ptr.vmem [resolvable:$true] %s269
          %272 = dma.hbm_to_vmem [thread:$0]  %s267, 64, %s270, %s255
        $region28: #{tpu_custom_call.1} parent=19 // pred_fallthru
          _
        // Predicated region
        $region29: #{tpu_custom_call.1} parent=19 // pred_check
          %p273 = pneg %p125
        $region30: #{tpu_custom_call.1} parent=19 // pred_check_branch
          %275 = sbr.rel (%p273) target = $region32
        $region31: #{tpu_custom_call.1} parent=19 // pred_region
          %s276 = sand.u32 %s18, 1
          %s277 = scalar_lea.sflag [#allocation9], %s276
          %s278 = sand.u32 %s115, 1
          %s279 = smul.addr %s278, 4
          %s280 = scalar_lea.vmem [#allocation10], %s279
          %s281 = sadd.s32 %s26, 2
          %s282 = sadd.s32 %s281, %s27
          %s284 = ssub.s32 64, 64
          %285 = vsyncadd %s277, %s284
          %s286 = smul.addr %s25, 3
          %s287 = sadd.s32 %s282, %s286
          %s288 = smul.addr %s287, 64
          %s289 = scalar_lea.hbm %s2, %s288
          %s291 = sshll.u32 %s280, 4
          %s292 = int_to_ptr.vmem [resolvable:$true] %s291
          %294 = dma.hbm_to_vmem [thread:$0]  %s289, 64, %s292, %s277
        $region32: #{tpu_custom_call.1} parent=19 // pred_fallthru
          _
      $region20: #{tpu_custom_call.1} parent=5 // pred_fallthru
        _
      %p295 = scmp.le.s32.totalorder 1, %s18
      %p296 = scmp.lt.s32.totalorder %s18, 3
      %p297 = pnand %p295, %p296
      %p298 = pneg %p297
      // Predicated region
      $region33: #{tpu_custom_call.1} parent=5 // pred_check
        _
      $region34: #{tpu_custom_call.1} parent=5 // pred_check_branch
        %300 = sbr.rel (%p297) target = $region36
      $region35: #{tpu_custom_call.1} parent=5 // pred_region
        %s301 = ssub.s32 %s18, 1
        %s302 = sand.u32 %s54, 1
        %s303 = scalar_lea.sflag [#allocation7], %s302
        %s304 = sand.u32 %s54, 1
        %s305 = smul.addr %s304, 4
        %s306 = scalar_lea.vmem [#allocation6], %s305
        // Predicated region
        $region37: #{tpu_custom_call.1} parent=35 // pred_check
          %p307 = pneg %p67
        $region38: #{tpu_custom_call.1} parent=35 // pred_check_branch
          %309 = sbr.rel (%p307) target = $region40
        $region39: #{tpu_custom_call.1} parent=35 // pred_region
          %310 = dma.done %s303, 64
        $region40: #{tpu_custom_call.1} parent=35 // pred_fallthru
          _
        %s311 = sand.u32 %s23, 1
        %s312 = scalar_lea.sflag [#allocation9], %s311
        %s313 = sand.u32 %s86, 1
        %s314 = smul.addr %s313, 4
        %s315 = scalar_lea.vmem [#allocation8], %s314
        // Predicated region
        $region41: #{tpu_custom_call.1} parent=35 // pred_check
          %p316 = pneg %p99
        $region42: #{tpu_custom_call.1} parent=35 // pred_check_branch
          %318 = sbr.rel (%p316) target = $region44
        $region43: #{tpu_custom_call.1} parent=35 // pred_region
          %319 = dma.done %s312, 64
        $region44: #{tpu_custom_call.1} parent=35 // pred_fallthru
          _
        %s320 = sand.u32 %s23, 1
        %s321 = scalar_lea.sflag [#allocation9], %s320
        %s322 = sand.u32 %s118, 1
        %s323 = smul.addr %s322, 4
        %s324 = scalar_lea.vmem [#allocation10], %s323
        // Predicated region
        $region45: #{tpu_custom_call.1} parent=35 // pred_check
          %p325 = pneg %p131
        $region46: #{tpu_custom_call.1} parent=35 // pred_check_branch
          %327 = sbr.rel (%p325) target = $region48
        $region47: #{tpu_custom_call.1} parent=35 // pred_region
          %328 = dma.done %s321, 64
        $region48: #{tpu_custom_call.1} parent=35 // pred_fallthru
          _
        %s329 = sand.u32 %s54, 1
        %s330 = scalar_lea.sflag [#allocation7], %s329
        %s331 = sand.u32 %s54, 1
        %s332 = smul.addr %s331, 4
        %s333 = scalar_lea.vmem [#allocation6], %s332
        %p334 = pneg %p67
        %p335 = pneg %p64
        %s336 = sand.u32 %s23, 1
        %s337 = scalar_lea.sflag [#allocation9], %s336
        %s338 = sand.u32 %s86, 1
        %s339 = smul.addr %s338, 4
        %s340 = scalar_lea.vmem [#allocation8], %s339
        %p341 = pneg %p99
        %p342 = pneg %p96
        %s343 = sand.u32 %s23, 1
        %s344 = scalar_lea.sflag [#allocation9], %s343
        %s345 = sand.u32 %s118, 1
        %s346 = smul.addr %s345, 4
        %s347 = scalar_lea.vmem [#allocation10], %s346
        %p348 = pneg %p131
        %p349 = pneg %p128
        %p350 = pneg %p152
        %p351 = pneg %p149
        %p352 = pneg %p180
        %p353 = pneg %p177
        %p354 = scmp.lt.s32.totalorder %s28, 1
        %s355 = scalar_select %p354, %s28, 1
        %p356 = scmp.lt.s32.totalorder %s29, 0
        %s357 = scalar_select %p356, %s29, 0
        %s358 = sadd.s32 %s357, %s355
        %s359 = smul.addr %s358, 4
        %s360 = scalar_lea.vmem %s4, %s359
        %p361 = pneg %p208
        %p362 = pneg %p205
        %p363 = scmp.lt.s32.totalorder %s28, 1
        %s364 = scalar_select %p363, %s28, 1
        %p365 = scmp.lt.s32.totalorder %s29, 0
        %s366 = scalar_select %p365, %s29, 0
        %s367 = sadd.s32 %s366, %s364
        %s368 = smul.addr %s367, 4
        %s369 = scalar_lea.vmem %s5, %s368
        %s370 = sadd.s32 %s29, %s30
        %s371 = sadd.s32 %s29, 1
        %s372 = sadd.s32 %s371, %s30
        %s373 = sadd.s32 %s29, 2
        %s374 = sadd.s32 %s373, %s30
        %p375 = scmp.lt.s32.totalorder %s28, 1
        %s376 = scalar_select %p375, %s28, 1
        %p377 = scmp.lt.s32.totalorder %s29, 0
        %s378 = scalar_select %p377, %s29, 0
        %s379 = sadd.s32 %s378, %s376
        %s380 = smul.addr %s379, 4
        %s381 = scalar_lea.vmem %s4, %s380
        %p382 = scmp.lt.s32.totalorder %s28, 1
        %s383 = scalar_select %p382, %s28, 1
        %p384 = scmp.lt.s32.totalorder %s29, 0
        %s385 = scalar_select %p384, %s29, 0
        %s386 = sadd.s32 %s385, %s383
        %s387 = smul.addr %s386, 4
        %s388 = scalar_lea.vmem %s5, %s387
        %p389 = scmp.eq.s32.totalorder %s30, 0
        // Predicated region
        $region49: #{tpu_custom_call.1} parent=35 // pred_check
          %p390 = pneg %p389
        $region50: #{tpu_custom_call.1} parent=35 // pred_check_branch
          %392 = sbr.rel (%p390) target = $region52
        $region51: #{tpu_custom_call.1} parent=35 // pred_region
          %vm393 = vcmask 3072
          %394 = vst.msk [vmem:[#allocation2] sm:$0xf] %vm393, -inf
        $region52: #{tpu_custom_call.1} parent=35 // pred_fallthru
          _
        %v395 = vld [vmem:[%s3] sm:$0xf]
        %v396 = vld [vmem:[%s306] sm:$0xf]
        %v397 = vld [vmem:[%s315] sm:$0xf]
        %v398 = vld [vmem:[%s324] sm:$0xf]
        %vm399 = vcmask 31744
        %v401 = vsel %vm399, %v395, 0
        %vm403 = vcmask 1043456
        %v405 = vsel %vm403, %v396, 0
        %407 = vmatprep.subr.mxu0 0.0
        %408 = vmatpush1.msra.mxu0 0.0
        %409 = vmatprep.subr.mxu0 0.0
        %410 = vmatpush1.msra.mxu0 0.0
        %411 = vmatprep.subr.mxu0 0.0
        %412 = vmatpush1.msra.mxu0 0.0
        %413 = vmatprep.subr.mxu0 0.0
        %414 = vmatpush1.msra.mxu0 0.0
        %415 = vmatprep.subr.mxu0 0.0
        %416 = vmatpush1.msra.mxu0 0.0
        %417 = vmatprep.subr.mxu0 0.0
        %418 = vmatpush1.msra.mxu0 0.0
        %419 = vmatprep.subr.mxu0 0.0
        %420 = vmatpush1.msra.mxu0 0.0
        %421 = vmatprep.subr.mxu0 0.0
        %422 = vmatpush1.msra.mxu0 0.0
        %423 = vmatprep.subr.mxu0 0.0
        %424 = vmatpush1.msra.mxu0 0.0
        %425 = vmatprep.subr.mxu0 0.0
        %426 = vmatpush1.msra.mxu0 0.0
        %427 = vmatprep.subr.mxu0 0.0
        %428 = vmatpush1.msra.mxu0 0.0
        %429 = vmatprep.subr.mxu0 0.0
        %430 = vmatpush1.msra.mxu0 0.0
        %431 = vmatprep.subr.mxu0 0.0
        %432 = vmatpush1.msra.mxu0 0.0
        %433 = vmatprep.subr.mxu0 0.0
        %434 = vmatpush1.msra.mxu0 0.0
        %435 = vmatprep.subr.mxu0 0.0
        %436 = vmatpush1.msra.mxu0 0.0
        %437 = vmatprep.subr.mxu0 0.0
        %438 = vmatpush1.msra.mxu0 %v405
        %439 = vmatprep.subr.mxu0 0.0
        %440 = vmatpush2.msra.mxu0 0.0
        %441 = vmatprep.subr.mxu0 0.0
        %442 = vmatpush2.msra.mxu0 0.0
        %443 = vmatprep.subr.mxu0 0.0
        %444 = vmatpush2.msra.mxu0 0.0
        %445 = vmatprep.subr.mxu0 0.0
        %446 = vmatpush2.msra.mxu0 0.0
        %447 = vmatprep.subr.mxu0 0.0
        %448 = vmatpush2.msra.mxu0 0.0
        %449 = vmatprep.subr.mxu0 0.0
        %450 = vmatpush2.msra.mxu0 0.0
        %451 = vmatprep.subr.mxu0 0.0
        %452 = vmatpush2.msra.mxu0 0.0
        %453 = vmatprep.subr.mxu0 0.0
        %454 = vmatpush2.msra.mxu0 0.0
        %455 = vmatprep.subr.mxu0 0.0
        %456 = vmatpush2.msra.mxu0 0.0
        %457 = vmatprep.subr.mxu0 0.0
        %458 = vmatpush2.msra.mxu0 0.0
        %459 = vmatprep.subr.mxu0 0.0
        %460 = vmatpush2.msra.mxu0 0.0
        %461 = vmatprep.subr.mxu0 0.0
        %462 = vmatpush2.msra.mxu0 0.0
        %463 = vmatprep.subr.mxu0 0.0
        %464 = vmatpush2.msra.mxu0 0.0
        %465 = vmatprep.subr.mxu0 0.0
        %466 = vmatpush2.msra.mxu0 0.0
        %467 = vmatprep.subr.mxu0 0.0
        %468 = vmatpush2.msra.mxu0 0.0
        %469 = vmatprep.subr.mxu0 0.0
        %470 = vmatpush2.msra.mxu0 0.0
        %471 = vmatprep.mubr.f32.mxu0 0.0
        %472 = vmatmul.mubr.f32.gmra.mxu0 %v401
        %v473 = vpop.f32.mrf.mxu0
        %v474 = vadd.f32 0.0, %v473
        %v475 = vpop.f32.mrf.mxu0
        %476 = vdwg.mxu0
        %v477 = vmul.f32 %v396, %v474
        %v479 = vsel %vm403, %v397, 0
        %481 = vmatprep.subr.mxu0 0.0
        %482 = vmatpush1.msra.mxu0 0.0
        %483 = vmatprep.subr.mxu0 0.0
        %484 = vmatpush1.msra.mxu0 0.0
        %485 = vmatprep.subr.mxu0 0.0
        %486 = vmatpush1.msra.mxu0 0.0
        %487 = vmatprep.subr.mxu0 0.0
        %488 = vmatpush1.msra.mxu0 0.0
        %489 = vmatprep.subr.mxu0 0.0
        %490 = vmatpush1.msra.mxu0 0.0
        %491 = vmatprep.subr.mxu0 0.0
        %492 = vmatpush1.msra.mxu0 0.0
        %493 = vmatprep.subr.mxu0 0.0
        %494 = vmatpush1.msra.mxu0 0.0
        %495 = vmatprep.subr.mxu0 0.0
        %496 = vmatpush1.msra.mxu0 0.0
        %497 = vmatprep.subr.mxu0 0.0
        %498 = vmatpush1.msra.mxu0 0.0
        %499 = vmatprep.subr.mxu0 0.0
        %500 = vmatpush1.msra.mxu0 0.0
        %501 = vmatprep.subr.mxu0 0.0
        %502 = vmatpush1.msra.mxu0 0.0
        %503 = vmatprep.subr.mxu0 0.0
        %504 = vmatpush1.msra.mxu0 0.0
        %505 = vmatprep.subr.mxu0 0.0
        %506 = vmatpush1.msra.mxu0 0.0
        %507 = vmatprep.subr.mxu0 0.0
        %508 = vmatpush1.msra.mxu0 0.0
        %509 = vmatprep.subr.mxu0 0.0
        %510 = vmatpush1.msra.mxu0 0.0
        %511 = vmatprep.subr.mxu0 0.0
        %512 = vmatpush1.msra.mxu0 %v479
        %513 = vmatprep.subr.mxu0 0.0
        %514 = vmatpush2.msra.mxu0 0.0
        %515 = vmatprep.subr.mxu0 0.0
        %516 = vmatpush2.msra.mxu0 0.0
        %517 = vmatprep.subr.mxu0 0.0
        %518 = vmatpush2.msra.mxu0 0.0
        %519 = vmatprep.subr.mxu0 0.0
        %520 = vmatpush2.msra.mxu0 0.0
        %521 = vmatprep.subr.mxu0 0.0
        %522 = vmatpush2.msra.mxu0 0.0
        %523 = vmatprep.subr.mxu0 0.0
        %524 = vmatpush2.msra.mxu0 0.0
        %525 = vmatprep.subr.mxu0 0.0
        %526 = vmatpush2.msra.mxu0 0.0
        %527 = vmatprep.subr.mxu0 0.0
        %528 = vmatpush2.msra.mxu0 0.0
        %529 = vmatprep.subr.mxu0 0.0
        %530 = vmatpush2.msra.mxu0 0.0
        %531 = vmatprep.subr.mxu0 0.0
        %532 = vmatpush2.msra.mxu0 0.0
        %533 = vmatprep.subr.mxu0 0.0
        %534 = vmatpush2.msra.mxu0 0.0
        %535 = vmatprep.subr.mxu0 0.0
        %536 = vmatpush2.msra.mxu0 0.0
        %537 = vmatprep.subr.mxu0 0.0
        %538 = vmatpush2.msra.mxu0 0.0
        %539 = vmatprep.subr.mxu0 0.0
        %540 = vmatpush2.msra.mxu0 0.0
        %541 = vmatprep.subr.mxu0 0.0
        %542 = vmatpush2.msra.mxu0 0.0
        %543 = vmatprep.subr.mxu0 0.0
        %544 = vmatpush2.msra.mxu0 0.0
        %545 = vmatprep.mubr.f32.mxu0 0.0
        %546 = vmatmul.mubr.f32.gmra.mxu0 %v401
        %v547 = vpop.f32.mrf.mxu0
        %v548 = vadd.f32 0.0, %v547
        %v549 = vpop.f32.mrf.mxu0
        %550 = vdwg.mxu0
        %v551 = vmul.f32 %v397, %v548
        %v552 = vadd.f32 %v477, %v551
        %v554 = vsel %vm403, %v398, 0
        %556 = vmatprep.subr.mxu0 0.0
        %557 = vmatpush1.msra.mxu0 0.0
        %558 = vmatprep.subr.mxu0 0.0
        %559 = vmatpush1.msra.mxu0 0.0
        %560 = vmatprep.subr.mxu0 0.0
        %561 = vmatpush1.msra.mxu0 0.0
        %562 = vmatprep.subr.mxu0 0.0
        %563 = vmatpush1.msra.mxu0 0.0
        %564 = vmatprep.subr.mxu0 0.0
        %565 = vmatpush1.msra.mxu0 0.0
        %566 = vmatprep.subr.mxu0 0.0
        %567 = vmatpush1.msra.mxu0 0.0
        %568 = vmatprep.subr.mxu0 0.0
        %569 = vmatpush1.msra.mxu0 0.0
        %570 = vmatprep.subr.mxu0 0.0
        %571 = vmatpush1.msra.mxu0 0.0
        %572 = vmatprep.subr.mxu0 0.0
        %573 = vmatpush1.msra.mxu0 0.0
        %574 = vmatprep.subr.mxu0 0.0
        %575 = vmatpush1.msra.mxu0 0.0
        %576 = vmatprep.subr.mxu0 0.0
        %577 = vmatpush1.msra.mxu0 0.0
        %578 = vmatprep.subr.mxu0 0.0
        %579 = vmatpush1.msra.mxu0 0.0
        %580 = vmatprep.subr.mxu0 0.0
        %581 = vmatpush1.msra.mxu0 0.0
        %582 = vmatprep.subr.mxu0 0.0
        %583 = vmatpush1.msra.mxu0 0.0
        %584 = vmatprep.subr.mxu0 0.0
        %585 = vmatpush1.msra.mxu0 0.0
        %586 = vmatprep.subr.mxu0 0.0
        %587 = vmatpush1.msra.mxu0 %v554
        %588 = vmatprep.subr.mxu0 0.0
        %589 = vmatpush2.msra.mxu0 0.0
        %590 = vmatprep.subr.mxu0 0.0
        %591 = vmatpush2.msra.mxu0 0.0
        %592 = vmatprep.subr.mxu0 0.0
        %593 = vmatpush2.msra.mxu0 0.0
        %594 = vmatprep.subr.mxu0 0.0
        %595 = vmatpush2.msra.mxu0 0.0
        %596 = vmatprep.subr.mxu0 0.0
        %597 = vmatpush2.msra.mxu0 0.0
        %598 = vmatprep.subr.mxu0 0.0
        %599 = vmatpush2.msra.mxu0 0.0
        %600 = vmatprep.subr.mxu0 0.0
        %601 = vmatpush2.msra.mxu0 0.0
        %602 = vmatprep.subr.mxu0 0.0
        %603 = vmatpush2.msra.mxu0 0.0
        %604 = vmatprep.subr.mxu0 0.0
        %605 = vmatpush2.msra.mxu0 0.0
        %606 = vmatprep.subr.mxu0 0.0
        %607 = vmatpush2.msra.mxu0 0.0
        %608 = vmatprep.subr.mxu0 0.0
        %609 = vmatpush2.msra.mxu0 0.0
        %610 = vmatprep.subr.mxu0 0.0
        %611 = vmatpush2.msra.mxu0 0.0
        %612 = vmatprep.subr.mxu0 0.0
        %613 = vmatpush2.msra.mxu0 0.0
        %614 = vmatprep.subr.mxu0 0.0
        %615 = vmatpush2.msra.mxu0 0.0
        %616 = vmatprep.subr.mxu0 0.0
        %617 = vmatpush2.msra.mxu0 0.0
        %618 = vmatprep.subr.mxu0 0.0
        %619 = vmatpush2.msra.mxu0 0.0
        %620 = vmatprep.mubr.f32.mxu0 0.0
        %621 = vmatmul.mubr.f32.gmra.mxu0 %v401
        %v622 = vpop.f32.mrf.mxu0
        %v623 = vadd.f32 0.0, %v622
        %v624 = vpop.f32.mrf.mxu0
        %625 = vdwg.mxu0
        %v626 = vmul.f32 %v398, %v623
        %v627 = vadd.f32 %v552, %v626
        %v628 = vlaneseq
        %v629 = vand.u32 %v628, 127
        %s630 = sadd.s32 %s29, %s30
        %s631 = smul.u32 %s630, 128
        %v632 = vstv %s631
        %v633 = vadd.s32 %v629, %v632
        %vm634 = vcmp.lt.s32.totalorder %v633, 16
        %v635 = vsel %vm634, %v627, -inf
        %v636 = vsel %vm403, %v635, -inf
        %637 = vmax.xlane.f32.xlu0 %v636
        %v638 = vpop.xlane.xlu0 %637
        %vm639 = vcmp.ge.f32.partialorder %v635, %v638
        %v640 = vsel %vm639, %v629, 128
        %v641 = vsel %vm403, %v640, 2147483647
        %v642 = vand.u32 %v641, 65535
        %v643 = vshra.s32 %v641, 16
        %v644 = vcvt.s32.f32 %v642
        %v645 = vcvt.s32.f32 %v643
        %646 = vmin.xlane.f32.xlu0 %v645
        %v647 = vpop.xlane.xlu0 %646
        %vm648 = vcmp.eq.f32.partialorder %v645, %v647
        %v649 = vsel %vm648, %v644, inf
        %650 = vmin.xlane.f32.xlu0 %v649
        %v651 = vpop.xlane.xlu0 %650
        %v652 = vcvt.f32.s32 %v651
        %v653 = vcvt.f32.s32 %v647
        %v654 = vshll.u32 %v653, 16
        %v655 = vadd.s32 %v654, %v652
        %vm656 = vcmp.eq.s32.totalorder %v629, %v655
        %v657 = vsel %vm656, %v396, 0.0
        %v658 = vsel %vm403, %v657, 0.0
        %659 = vadd.xlane.f32.xlu0 %v658
        %v660 = vpop.xlane.xlu0 %659
        %v661 = vsel %vm656, %v397, 0.0
        %v662 = vsel %vm403, %v661, 0.0
        %663 = vadd.xlane.f32.xlu0 %v662
        %v664 = vpop.xlane.xlu0 %663
        %v665 = vsel %vm656, %v398, 0.0
        %v666 = vsel %vm403, %v665, 0.0
        %667 = vadd.xlane.f32.xlu0 %v666
        %v668 = vpop.xlane.xlu0 %667
        %v669 = vld [vmem:[#allocation2] sm:$0xf]
        %vm670 = vcmp.gt.f32.partialorder %v638, %v669
        %s671 = scalar_select %p389, 1, 0
        %v672 = vstv %s671
        %vm673 = vcmp.eq.s32.totalorder %v672, 1
        %vm674 = vmor %vm670, %vm673
        %v675 = vsel %vm674, %v638, %v669
        %vm676 = vcmask 3072
        %677 = vst.msk [vmem:[#allocation2] sm:$0xf] %vm676, %v675
        %v678 = vld [vmem:[#allocation3] sm:$0xf]
        %v679 = vsel %vm674, %v660, %v678
        %680 = vst.msk [vmem:[#allocation3] sm:$0xf] %vm676, %v679
        %v681 = vld [vmem:[#allocation4] sm:$0xf]
        %v682 = vsel %vm674, %v664, %v681
        %683 = vst.msk [vmem:[#allocation4] sm:$0xf] %vm676, %v682
        %v684 = vld [vmem:[#allocation5] sm:$0xf]
        %v685 = vsel %vm674, %v668, %v684
        %686 = vst.msk [vmem:[#allocation5] sm:$0xf] %vm676, %v685
        // Predicated region
        $region53: #{tpu_custom_call.1} parent=35 // pred_check
          %p687 = pneg %p389
        $region54: #{tpu_custom_call.1} parent=35 // pred_check_branch
          %689 = sbr.rel (%p687) target = $region56
        $region55: #{tpu_custom_call.1} parent=35 // pred_region
          %v690 = vld [vmem:[#allocation3] sm:$0xf]
          %v691 = vld [vmem:[#allocation4] sm:$0xf]
          %v692 = vld [vmem:[#allocation5] sm:$0xf]
          %694 = vrot.lane.b32.xlu0 %v691, 1
          %v695 = vpop.permute.xlu0 %694
          %698 = vrot.lane.b32.xlu0 %v692, 2
          %v699 = vpop.permute.xlu0 %698
          %vm701 = vcmask 7168
          %v702 = vsel %vm701, %v690, %v695
          %vm703 = vcmask 15360
          %v704 = vsel %vm703, %v702, %v699
          %vm705 = vcmask 19456
          %706 = vst.msk [vmem:[%s381] sm:$0xf] %vm705, %v704
          %v707 = vld [vmem:[#allocation2] sm:$0xf]
          %708 = vst.msk [vmem:[%s388] sm:$0xf] %vm676, %v707
        $region56: #{tpu_custom_call.1} parent=35 // pred_fallthru
          _
        %p709 = scmp.lt.s32.totalorder %s28, 1
        %s710 = scalar_select %p709, %s28, 1
        %p711 = scmp.lt.s32.totalorder %s29, 0
        %s712 = scalar_select %p711, %s29, 0
        %s713 = sadd.s32 %s712, %s710
        %s714 = smul.addr %s713, 4
        %s715 = scalar_lea.vmem %s4, %s714
        %p716 = scmp.lt.s32.totalorder %s28, 1
        %s717 = scalar_select %p716, %s28, 1
        %p718 = scmp.lt.s32.totalorder %s29, 0
        %s719 = scalar_select %p718, %s29, 0
        %s720 = sadd.s32 %s719, %s717
        %s721 = smul.addr %s720, 4
        %s722 = scalar_lea.vmem %s5, %s721
        // Predicated region
        $region57: #{tpu_custom_call.1} parent=35 // pred_check
          %p723 = pneg %p177
        $region58: #{tpu_custom_call.1} parent=35 // pred_check_branch
          %725 = sbr.rel (%p723) target = $region60
        $region59: #{tpu_custom_call.1} parent=35 // pred_region
          _
        $region60: #{tpu_custom_call.1} parent=35 // pred_fallthru
          _
        // Predicated region
        $region61: #{tpu_custom_call.1} parent=35 // pred_check
          %p726 = pneg %p205
        $region62: #{tpu_custom_call.1} parent=35 // pred_check_branch
          %728 = sbr.rel (%p726) target = $region64
        $region63: #{tpu_custom_call.1} parent=35 // pred_region
          _
        $region64: #{tpu_custom_call.1} parent=35 // pred_fallthru
          _
      $region36: #{tpu_custom_call.1} parent=5 // pred_fallthru
        _
      %p729 = scmp.le.s32.totalorder 2, %s18
      // Predicated region
      $region65: #{tpu_custom_call.1} parent=5 // pred_check
        %p730 = pneg %p729
      $region66: #{tpu_custom_call.1} parent=5 // pred_check_branch
        %732 = sbr.rel (%p730) target = $region68
      $region67: #{tpu_custom_call.1} parent=5 // pred_region
        %s733 = ssub.s32 %s18, 2
        // Predicated region
        $region69: #{tpu_custom_call.1} parent=67 // pred_check
          %p734 = pneg %p183
        $region70: #{tpu_custom_call.1} parent=67 // pred_check_branch
          %736 = sbr.rel (%p734) target = $region72
        $region71: #{tpu_custom_call.1} parent=67 // pred_region
          %p737 = scmp.lt.s32.totalorder %s31, 1
          %s738 = scalar_select %p737, %s31, 1
          %p739 = scmp.lt.s32.totalorder %s32, 0
          %s740 = scalar_select %p739, %s32, 0
          %s741 = sadd.s32 %s740, %s738
          %s742 = smul.addr %s741, 4
          %s743 = scalar_lea.vmem %s4, %s742
        $region72: #{tpu_custom_call.1} parent=67 // pred_fallthru
          _
        // Predicated region
        $region73: #{tpu_custom_call.1} parent=67 // pred_check
          %p744 = pneg %p211
        $region74: #{tpu_custom_call.1} parent=67 // pred_check_branch
          %746 = sbr.rel (%p744) target = $region76
        $region75: #{tpu_custom_call.1} parent=67 // pred_region
          %p747 = scmp.lt.s32.totalorder %s31, 1
          %s748 = scalar_select %p747, %s31, 1
          %p749 = scmp.lt.s32.totalorder %s32, 0
          %s750 = scalar_select %p749, %s32, 0
          %s751 = sadd.s32 %s750, %s748
          %s752 = smul.addr %s751, 4
          %s753 = scalar_lea.vmem %s5, %s752
        $region76: #{tpu_custom_call.1} parent=67 // pred_fallthru
          _
      $region68: #{tpu_custom_call.1} parent=5 // pred_fallthru
        _
    $region6: #{tpu_custom_call.1} parent=1 // loop_footer
      %s22 = sadd.s32 1, %s18
    $region7: #{tpu_custom_call.1} parent=1 // loop_footer_branch
      %17 = sbr.rel target = $region3
    $region8: #{tpu_custom_call.1} parent=1 // loop_exit
      _
    %754 = vsyncpa [#allocation7], 1
    %s755 = scalar_lea.sflag [#allocation7], 1
    %756 = vsyncpa %s755, 1
    %757 = vsyncpa [#allocation9], 1
    %s758 = scalar_lea.sflag [#allocation9], 1
    %759 = vsyncpa %s758, 1

</llo_original>
